<compile_context>
chip_gen: v7x
topology: tpu7x:2x2x1
jax: 0.10.0
libtpu: 0.0.40
codegen_flags: <defaults>
</compile_context>

<pallas_src>
import functools

import jax
import jax.numpy as jnp
from jax import lax, random
from jax.experimental import pallas as pl
from jax.experimental.pallas import tpu as pltpu

VMEM_SPEC = pl.BlockSpec(memory_space=pltpu.MemorySpace.VMEM)
SMEM_SPEC = pl.BlockSpec(memory_space=pltpu.MemorySpace.SMEM)
_CONV_PARAMS = pltpu.CompilerParams(vmem_limit_bytes=32 * 1024 * 1024)


# ----------------------------- Pallas kernels ------------------------------ #

def _mapping_kernel(z_ref, w0_ref, b0_ref, ws_ref, bs_ref, o_ref):
    """PixelNorm + 8 weight-scaled linears (ReLU after the first 7), bf16 MXU operands."""
    z = z_ref[...]
    h = z * lax.rsqrt(jnp.mean(z * z, axis=-1, keepdims=True) + 1e-8)   # PixelNorm (f32)
    h = jnp.dot(h.astype(jnp.bfloat16), w0_ref[...],
                preferred_element_type=jnp.float32) + b0_ref[...]
    h = jnp.maximum(h, 0.0)
    for i in range(7):
        h = jnp.dot(h.astype(jnp.bfloat16), ws_ref[i],
                    preferred_element_type=jnp.float32) + bs_ref[i:i + 1, :]
        if i < 6:                         # no ReLU after the last WSLinear
            h = jnp.maximum(h, 0.0)
    o_ref[...] = h.astype(o_ref.dtype)


def _style_kernel(x_ref, w_ref, b_ref, o_ref):
    """Style bank: every AdaIN scale+bias projection in one bf16 matmul, f32 output."""
    o_ref[...] = jnp.dot(x_ref[...], w_ref[...],
                         preferred_element_type=jnp.float32) + b_ref[...]


def _const_noise_adain_kernel(x_ref, n_ref, nw_ref, ys_ref, yb_ref, o_ref):
    """AddNoise + InstanceNorm + AdaIN on the batch-1 learned constant, broadcast to batch B."""
    x = x_ref[0] + nw_ref[...] * n_ref[0]                     # (HW, C) f32
    mean = jnp.mean(x, axis=0, keepdims=True)
    d = x - mean
    var = jnp.mean(d * d, axis=0, keepdims=True)
    xn = d * lax.rsqrt(var + 1e-5)                            # InstanceNorm2d (eps=1e-5)
    out = ys_ref[...][:, None, :] * xn[None, :, :] + yb_ref[...][:, None, :]   # one broadcast store
    o_ref[...] = out.astype(o_ref.dtype)


def _conv_kernel(x_ref, w_ref, b_ref, o_ref):
    """3x3 conv as one (B*HW, 9*Cin) @ (9*Cin, Cout) im2col matmul for the whole batch."""
    y = jnp.dot(x_ref[...], w_ref[...], preferred_element_type=jnp.float32) + b_ref[...]
    o_ref[...] = y.astype(o_ref.dtype)


def _conv_noise_adain_kernel(x_ref, w_ref, b_ref, n_ref, nw_ref, ys_ref, yb_ref, o_ref,
                             *, hw, lrelu):
    """Fused 3x3 conv (whole-batch im2col matmul) + AddNoise (+LeakyReLU) + InstanceNorm + AdaIN.

    x_ref: (B*HW, 9*Cin) bf16, o_ref: (B*HW, Cout) bf16; per-sample InstanceNorm runs over
    static, sublane-aligned (hw, Cout) slices.
    """
    y = jnp.dot(x_ref[...], w_ref[...], preferred_element_type=jnp.float32)   # (B*HW, Cout) f32
    y = y + b_ref[...] + nw_ref[...] * n_ref[...]             # bias + per-channel-weighted noise
    if lrelu:
        y = jnp.where(y > 0, y, 0.2 * y)
    nb = y.shape[0] // hw
    for b in range(nb):                                       # tiny static unroll over batch
        blk = y[b * hw:(b + 1) * hw, :]
        mean = jnp.mean(blk, axis=0, keepdims=True)           # InstanceNorm2d over H*W
        d = blk - mean
        var = jnp.mean(d * d, axis=0, keepdims=True)
        xn = d * lax.rsqrt(var + 1e-5)
        res = ys_ref[b:b + 1, :] * xn + yb_ref[b:b + 1, :]    # AdaIN
        o_ref[b * hw:(b + 1) * hw, :] = res.astype(o_ref.dtype)


def _rgb_fade_kernel(alpha_ref, up_ref, gen_ref, wu_ref, bu_ref, wo_ref, bo_ref, o_ref):
    """Both 1x1 to_rgb convs + fade-in tanh in one launch; alpha comes from SMEM (no recompile).

    alpha is folded into the tiny weights/biases (conv is linear), output is (B, img_c, H*W)
    so the full-resolution stores are lane-dense.
    """
    alpha = alpha_ref[0, 0]
    dn = (((1,), (1,)), ((), ()))                             # contract the channel axes
    wu = ((1.0 - alpha) * wu_ref[...]).astype(jnp.bfloat16)
    wo = (alpha * wo_ref[...]).astype(jnp.bfloat16)
    bias = (1.0 - alpha) * bu_ref[...] + alpha * bo_ref[...]
    for b in range(up_ref.shape[0]):                          # tiny static unroll over batch
        yu = lax.dot_general(wu, up_ref[b], dn, preferred_element_type=jnp.float32)
        yo = lax.dot_general(wo, gen_ref[b], dn, preferred_element_type=jnp.float32)
        o_ref[b] = jnp.tanh(yu + yo + bias)


def _rgb_kernel(x_ref, w_ref, b_ref, o_ref):
    """1x1 to_rgb conv, lane-dense (img_c, H*W) per-sample output (steps == 0 path, no tanh)."""
    dn = (((1,), (1,)), ((), ()))
    w = w_ref[...].astype(jnp.bfloat16)
    for b in range(x_ref.shape[0]):
        y = lax.dot_general(w, x_ref[b], dn, preferred_element_type=jnp.float32)
        o_ref[b] = y + b_ref[...]


# ------------------------------ kernel wrappers ----------------------------- #

def mapping_forward(p, z):
    return pl.pallas_call(
        _mapping_kernel,
        out_shape=jax.ShapeDtypeStruct((z.shape[0], p["map_w0"].shape[1]), jnp.bfloat16),
        in_specs=[VMEM_SPEC] * 5,
        out_specs=VMEM_SPEC,
    )(z, p["map_w0"], p["map_b0"], p["map_ws"], p["map_bs"])


def style_bank(x, w, b):
    return pl.pallas_call(
        _style_kernel,
        out_shape=jax.ShapeDtypeStruct((x.shape[0], w.shape[1]), jnp.float32),
        in_specs=[VMEM_SPEC] * 3,
        out_specs=VMEM_SPEC,
    )(x, w, b)


def const_noise_adain(x_flat, noise, nw, ys, yb):
    B = ys.shape[0]
    _, HW, C = x_flat.shape
    return pl.pallas_call(
        _const_noise_adain_kernel,
        out_shape=jax.ShapeDtypeStruct((B, HW, C), jnp.bfloat16),
        in_specs=[VMEM_SPEC] * 5,
        out_specs=VMEM_SPEC,
    )(x_flat, noise, nw, ys, yb)


def conv3x3_plain(xcol, cp):
    B, HW, K = xcol.shape
    cout = cp["w"].shape[-1]
    y = pl.pallas_call(
        _conv_kernel,
        out_shape=jax.ShapeDtypeStruct((B * HW, cout), jnp.bfloat16),
        in_specs=[VMEM_SPEC] * 3,
        out_specs=VMEM_SPEC,
        compiler_params=_CONV_PARAMS,
    )(xcol.reshape(B * HW, K), cp["w"], cp["b"])
    return y.reshape(B, HW, cout)


def conv_noise_adain(xcol, cp, noise, nw, ys, yb, *, lrelu=True):
    B, HW, K = xcol.shape
    cout = cp["w"].shape[-1]
    y = pl.pallas_call(
        functools.partial(_conv_noise_adain_kernel, hw=HW, lrelu=lrelu),
        out_shape=jax.ShapeDtypeStruct((B * HW, cout), jnp.bfloat16),
        in_specs=[VMEM_SPEC] * 7,
        out_specs=VMEM_SPEC,
        compiler_params=_CONV_PARAMS,
    )(xcol.reshape(B * HW, K), cp["w"], cp["b"], noise.reshape(B * HW, 1), nw, ys, yb)
    return y.reshape(B, HW, cout)


def rgb_fade(up_flat, gen_flat, rgb_u, rgb_o, alpha):
    B, HW, _ = up_flat.shape
    cimg = rgb_o["w"].shape[0]
    alpha_arr = jnp.asarray(alpha, jnp.float32).reshape(1, 1)     # SMEM scalar, traceable
    return pl.pallas_call(
        _rgb_fade_kernel,
        out_shape=jax.ShapeDtypeStruct((B, cimg, HW), jnp.float32),
        in_specs=[SMEM_SPEC] + [VMEM_SPEC] * 6,
        out_specs=VMEM_SPEC,
        compiler_params=_CONV_PARAMS,
    )(alpha_arr, up_flat, gen_flat, rgb_u["w"], rgb_u["b"], rgb_o["w"], rgb_o["b"])


def rgb_only(x_flat, rgb):
    B, HW, C = x_flat.shape
    cimg = rgb["w"].shape[0]
    return pl.pallas_call(
        _rgb_kernel,
        out_shape=jax.ShapeDtypeStruct((B, cimg, HW), jnp.float32),
        in_specs=[VMEM_SPEC] * 3,
        out_specs=VMEM_SPEC,
        compiler_params=_CONV_PARAMS,
    )(x_flat, rgb["w"], rgb["b"])


# --------------------------- plain-JAX glue pieces --------------------------- #

def _im2col3x3(x):
    """NHWC (bf16) -> (B, H*W, 9*C) zero-padded 3x3 patches (pure re-indexing, kept in XLA).

    TODO(synk): at production resolutions replace with in-kernel halo im2col (see header).
    """
    B, H, W, C = x.shape
    xp = jnp.pad(x, ((0, 0), (1, 1), (1, 1), (0, 0)))
    cols = [xp[:, dy:dy + H, dx:dx + W, :] for dy in range(3) for dx in range(3)]
    return jnp.concatenate(cols, axis=-1).reshape(B, H * W, 9 * C)


def _up1d(a, axis):
    """1-D half of F.interpolate(scale_factor=2, mode='bilinear', align_corners=False)."""
    n = a.shape[axis]
    idx = jnp.arange(2 * n, dtype=jnp.float32)
    src = jnp.maximum((idx + 0.5) * 0.5 - 0.5, 0.0)
    lo = jnp.floor(src).astype(jnp.int32)
    hi = jnp.minimum(lo + 1, n - 1)
    frac = (src - lo.astype(jnp.float32)).astype(a.dtype)      # 0 / 0.25 / 0.75: exact in bf16
    shape = [1] * a.ndim
    shape[axis] = 2 * n
    frac = frac.reshape(shape)
    one = jnp.asarray(1.0, a.dtype)
    return jnp.take(a, lo, axis=axis) * (one - frac) + jnp.take(a, hi, axis=axis) * frac


def upsample2x_bilinear(x):   # NHWC, dtype-preserving (bf16 in -> bf16 out)
    return _up1d(_up1d(x, 1), 2)


# ------------------------------- parameters --------------------------------- #

def init_params(key, z_dim, w_dim, in_channels, factors, img_channels=3):
    kit = iter(random.split(key, 512))
    nrm = lambda shape: random.normal(next(kit), shape, jnp.float32)

    def ws_linear_w(din, dout):
        # equalized-lr: fold scale = sqrt(2/din) into the stored (Din, Dout) weight
        return nrm((dout, din)).T * (2.0 / din) ** 0.5

    def ws_conv3_p(cin, cout, scale=None):
        s = (2.0 / (cin * 9)) ** 0.5 if scale is None else scale
        w = jnp.transpose(nrm((cout, cin, 3, 3)), (2, 3, 1, 0)).reshape(9 * cin, cout) * s
        return {"w": w.astype(jnp.bfloat16),                  # bf16 MXU operand
                "b": jnp.zeros((1, cout), jnp.float32)}

    def ws_rgb_p(cin, cimg):
        # 1x1 WSConv2d stored transposed (Cimg, Cin) for lane-dense (Cimg, H*W) outputs;
        # tiny, kept f32 (cast to bf16 in-kernel after the alpha fold).
        return {"w": nrm((cimg, cin)) * (2.0 / cin) ** 0.5,
                "b": jnp.zeros((cimg, 1), jnp.float32)}

    p = {}
    # mapping network (PixelNorm + 8 WSLinear), bf16 weights, f32 biases
    p["map_w0"] = ws_linear_w(z_dim, w_dim).astype(jnp.bfloat16)
    p["map_b0"] = jnp.zeros((1, w_dim), jnp.float32)
    p["map_ws"] = jnp.stack([ws_linear_w(w_dim, w_dim) for _ in range(7)]).astype(jnp.bfloat16)
    p["map_bs"] = jnp.zeros((7, w_dim), jnp.float32)

    # single concatenated "style bank" holding every AdaIN scale+bias linear projection
    C0 = in_channels
    chans = [int(in_channels * f) for f in factors]
    style_cols, layout = [], []

    def add_adain(name, c):
        style_cols.append(ws_linear_w(w_dim, c))              # style scale
        style_cols.append(ws_linear_w(w_dim, c))              # style bias
        layout.append((name, c))

    add_adain("init1", C0)
    add_adain("init2", C0)
    for i in range(len(factors) - 1):
        add_adain(f"b{i}a1", chans[i + 1])
        add_adain(f"b{i}a2", chans[i + 1])
    p["style_w"] = jnp.concatenate(style_cols, axis=1).astype(jnp.bfloat16)
    p["style_b"] = jnp.zeros((1, p["style_w"].shape[1]), jnp.float32)
    p["style_layout"] = tuple(layout)                         # python metadata (static)

    # 4x4 learned constant, stored flattened (1, 16, C)
    p["constant"] = jnp.ones((1, 16, C0), jnp.float32)

    # init_conv is a plain nn.Conv2d (no equalized-lr scale)
    p["init_conv"] = ws_conv3_p(C0, C0, scale=(1.0 / (C0 * 9)) ** 0.5)

    # TODO(synk): PyTorch AddNoise initializes its per-channel weight to zeros; kept identical
    # here for parity, so the noise term is computed but contributes 0 at init.
    p["init_noise_1"] = jnp.zeros((1, C0), jnp.float32)
    p["init_noise_2"] = jnp.zeros((1, C0), jnp.float32)

    p["blocks"] = []
    p["to_rgb"] = [ws_rgb_p(C0, img_channels)]
    for i in range(len(factors) - 1):
        cin, cout = chans[i], chans[i + 1]
        p["blocks"].append({
            "conv1": ws_conv3_p(cin, cout),
            "conv2": ws_conv3_p(cout, cout),
            "noise1": jnp.zeros((1, cout), jnp.float32),
            "noise2": jnp.zeros((1, cout), jnp.float32),
        })
        p["to_rgb"].append(ws_rgb_p(cout, img_channels))
    return p


# --------------------------------- forward ---------------------------------- #

def _compute_styles(p, w, steps):
    """One fused linear produces every (scale, bias) AdaIN style actually used for `steps`."""
    layout = p["style_layout"]
    n_used = 1 if steps == 0 else 2 + 2 * steps               # init1[, init2, blocks 0..steps-1]
    used = layout[:n_used]
    width = sum(2 * c for _, c in used)
    st = style_bank(w, p["style_w"][:, :width], p["style_b"][:, :width])
    styles, off = {}, 0
    for name, c in used:
        styles[name] = (st[:, off:off + c], st[:, off + c:off + 2 * c])
        off += 2 * c
    return styles


def generator_forward(params, z, alpha, steps, noise_key):
    """Matches Generator.forward(x=z, alpha, steps); returns NCHW. Convs run in bf16 with f32
    accumulation/InstanceNorm (slightly looser than PyTorch's f32 convs — documented tolerance)."""
    B = z.shape[0]
    C0 = params["constant"].shape[-1]
    cimg = params["to_rgb"][0]["w"].shape[0]

    w = mapping_forward(params, z)                            # (B, w_dim) bf16, one launch
    styles = _compute_styles(params, w, steps)                # one launch for all AdaIN styles
    keys = random.split(noise_key, 2 + 2 * max(steps, 1))

    # out = init_adaIN_1(init_noise_1(constant), w); constant has batch 1, so (like the PyTorch
    # module) its noise is drawn with batch 1 and shared across the batch.
    noise0 = random.normal(keys[0], (1, 16, 1), jnp.float32)
    out = const_noise_adain(params["constant"], noise0, params["init_noise_1"],
                            *styles["init1"])                 # (B, 16, C0) bf16

    xcol = _im2col3x3(out.reshape(B, 4, 4, C0))

    if steps == 0:
        out = conv3x3_plain(xcol, params["init_conv"])        # (B, 16, C0) bf16
        y = rgb_only(out, params["to_rgb"][0])                # (B, 3, 16) f32, no tanh
        return y.reshape(B, cimg, 4, 4)                       # NCHW via pure reshape

    # out = init_adaIN_2(init_l_relu(init_noise_2(init_conv(out))), w)  -- fused in one kernel
    noise1 = random.normal(keys[1], (B, 16, 1), jnp.float32)
    out = conv_noise_adain(xcol, params["init_conv"], noise1, params["init_noise_2"],
                           *styles["init2"], lrelu=True)      # (B, 16, C0) bf16

    H = W = 4
    out_nhwc = out.reshape(B, H, W, C0)
    up_nhwc = out_nhwc
    for step in range(steps):
        bp = params["blocks"][step]
        H, W = 2 * H, 2 * W
        up_nhwc = upsample2x_bilinear(out_nhwc)               # (B, H, W, Cin) bf16
        k1, k2 = keys[2 + 2 * step], keys[3 + 2 * step]

        xcol = _im2col3x3(up_nhwc)
        n1 = random.normal(k1, (B, H * W, 1), jnp.float32)
        h = conv_noise_adain(xcol, bp["conv1"], n1, bp["noise1"],
                             *styles[f"b{step}a1"], lrelu=True)

        cout = bp["conv2"]["w"].shape[-1]
        xcol = _im2col3x3(h.reshape(B, H, W, cout))
        n2 = random.normal(k2, (B, H * W, 1), jnp.float32)
        h = conv_noise_adain(xcol, bp["conv2"], n2, bp["noise2"],
                             *styles[f"b{step}a2"], lrelu=True)
        out_nhwc = h.reshape(B, H, W, cout)

    up_flat = up_nhwc.reshape(B, H * W, up_nhwc.shape[-1])
    out_flat = out_nhwc.reshape(B, H * W, out_nhwc.shape[-1])
    y = rgb_fade(up_flat, out_flat, params["to_rgb"][steps - 1], params["to_rgb"][steps], alpha)
    return y.reshape(B, cimg, H, W)                           # NCHW via pure reshape


# ----------------------------------- main ------------------------------------ #

if __name__ == "__main__":
    z_dim = 32
    w_dim = 32
    in_channels = 32
    img_channels = 3
    factors = [1, 1, 1, 1 / 2, 1 / 4, 1 / 8, 1 / 16, 1 / 32]
    batch = 2
    steps = 2          # 4x4 -> 8x8 -> 16x16
    alpha = 0.5

    key = random.PRNGKey(0)
    k_params, k_z, k_noise = random.split(key, 3)
    params = init_params(k_params, z_dim, w_dim, in_channels, factors, img_channels)
    z = random.normal(k_z, (batch, z_dim), jnp.float32)

    out = generator_forward(params, z, alpha, steps, k_noise)
    out = jax.block_until_ready(out)

    expected = (batch, img_channels, 4 * (2 ** steps), 4 * (2 ** steps))
    assert out.shape == expected, (out.shape, expected)
    assert bool(jnp.all(jnp.isfinite(out)))
    assert bool(jnp.all(jnp.abs(out) <= 1.0 + 1e-6))          # tanh output range

    # alpha is now an SMEM scalar: a different value must NOT require a fresh Mosaic compile.
    out_b = jax.block_until_ready(generator_forward(params, z, 0.25, steps, k_noise))
    assert out_b.shape == expected
    assert bool(jnp.all(jnp.isfinite(out_b)))

    # steps == 0 path (4x4, no fade / no tanh) exercises the plain-conv and rgb-only kernels.
    out0 = jax.block_until_ready(generator_forward(params, z, alpha, 0, k_noise))
    assert out0.shape == (batch, img_channels, 4, 4)
    assert bool(jnp.all(jnp.isfinite(out0)))

    print("KERNEL_OK")
</pallas_src>

<mosaic_0001>
module attributes {stable_mosaic.version = 11 : i64} {
  func.func @_mapping_kernel(%arg0: memref<2x32xf32, #tpu.memory_space<vmem>>, %arg1: memref<32x32xbf16, #tpu.memory_space<vmem>>, %arg2: memref<1x32xf32, #tpu.memory_space<vmem>>, %arg3: memref<7x32x32xbf16, #tpu.memory_space<vmem>>, %arg4: memref<7x32xf32, #tpu.memory_space<vmem>>, %arg5: memref<2x32xbf16, #tpu.memory_space<vmem>>) attributes {dimension_semantics = [], scalar_prefetch = 0 : i64, scratch_operands = 0 : i64, tpu.core_type = #tpu.core_type<tc>} {
    %c0 = arith.constant 0 : index
    %c0_0 = arith.constant 0 : index
    %0 = vector.load %arg0[%c0, %c0_0] : memref<2x32xf32, #tpu.memory_space<vmem>>, vector<2x32xf32>
    %1 = arith.mulf %0, %0 : vector<2x32xf32>
    %cst = arith.constant dense<0.000000e+00> : vector<2xf32>
    %2 = vector.multi_reduction <add>, %1, %cst [1] : vector<2x32xf32> to vector<2xf32>
    %3 = vector.shape_cast %2 : vector<2xf32> to vector<2x1xf32>
    %cst_1 = arith.constant 3.200000e+01 : f32
    %4 = vector.broadcast %cst_1 : f32 to vector<2x1xf32>
    %5 = arith.divf %3, %4 : vector<2x1xf32>
    %cst_2 = arith.constant 9.99999993E-9 : f32
    %6 = vector.broadcast %cst_2 : f32 to vector<2x1xf32>
    %7 = arith.addf %5, %6 : vector<2x1xf32>
    %8 = math.rsqrt %7 : vector<2x1xf32>
    %9 = vector.broadcast %8 : vector<2x1xf32> to vector<2x32xf32>
    %10 = arith.mulf %0, %9 : vector<2x32xf32>
    %11 = arith.truncf %10 : vector<2x32xf32> to vector<2x32xbf16>
    %c0_3 = arith.constant 0 : index
    %c0_4 = arith.constant 0 : index
    %12 = vector.load %arg1[%c0_3, %c0_4] : memref<32x32xbf16, #tpu.memory_space<vmem>>, vector<32x32xbf16>
    %cst_5 = arith.constant dense<0.000000e+00> : vector<2x32xf32>
    %13 = tpu.matmul %11, %12, %cst_5 {dimension_numbers = #tpu.dot_dimension_numbers<[1], [0], [0], [1], [0, 0, 1, 1], [], []>} : vector<2x32xbf16>, vector<32x32xbf16>, vector<2x32xf32> -> vector<2x32xf32>
    %c0_6 = arith.constant 0 : index
    %c0_7 = arith.constant 0 : index
    %14 = vector.load %arg2[%c0_6, %c0_7] : memref<1x32xf32, #tpu.memory_space<vmem>>, vector<1x32xf32>
    %15 = vector.broadcast %14 : vector<1x32xf32> to vector<2x32xf32>
    %16 = arith.addf %13, %15 : vector<2x32xf32>
    %cst_8 = arith.constant 0.000000e+00 : f32
    %17 = vector.broadcast %cst_8 : f32 to vector<2x32xf32>
    %18 = arith.maximumf %16, %17 : vector<2x32xf32>
    %19 = arith.truncf %18 : vector<2x32xf32> to vector<2x32xbf16>
    %c0_9 = arith.constant 0 : index
    %c0_10 = arith.constant 0 : index
    %c0_11 = arith.constant 0 : index
    %20 = vector.load %arg3[%c0_9, %c0_10, %c0_11] : memref<7x32x32xbf16, #tpu.memory_space<vmem>>, vector<1x32x32xbf16>
    %21 = vector.shape_cast %20 : vector<1x32x32xbf16> to vector<32x32xbf16>
    %cst_12 = arith.constant dense<0.000000e+00> : vector<2x32xf32>
    %22 = tpu.matmul %19, %21, %cst_12 {dimension_numbers = #tpu.dot_dimension_numbers<[1], [0], [0], [1], [0, 0, 1, 1], [], []>} : vector<2x32xbf16>, vector<32x32xbf16>, vector<2x32xf32> -> vector<2x32xf32>
    %c0_13 = arith.constant 0 : index
    %c0_14 = arith.constant 0 : index
    %23 = vector.load %arg4[%c0_13, %c0_14] : memref<7x32xf32, #tpu.memory_space<vmem>>, vector<1x32xf32>
    %24 = vector.broadcast %23 : vector<1x32xf32> to vector<2x32xf32>
    %25 = arith.addf %22, %24 : vector<2x32xf32>
    %cst_15 = arith.constant 0.000000e+00 : f32
    %26 = vector.broadcast %cst_15 : f32 to vector<2x32xf32>
    %27 = arith.maximumf %25, %26 : vector<2x32xf32>
    %28 = arith.truncf %27 : vector<2x32xf32> to vector<2x32xbf16>
    %c1 = arith.constant 1 : index
    %c0_16 = arith.constant 0 : index
    %c0_17 = arith.constant 0 : index
    %29 = vector.load %arg3[%c1, %c0_16, %c0_17] : memref<7x32x32xbf16, #tpu.memory_space<vmem>>, vector<1x32x32xbf16>
    %30 = vector.shape_cast %29 : vector<1x32x32xbf16> to vector<32x32xbf16>
    %cst_18 = arith.constant dense<0.000000e+00> : vector<2x32xf32>
    %31 = tpu.matmul %28, %30, %cst_18 {dimension_numbers = #tpu.dot_dimension_numbers<[1], [0], [0], [1], [0, 0, 1, 1], [], []>} : vector<2x32xbf16>, vector<32x32xbf16>, vector<2x32xf32> -> vector<2x32xf32>
    %c1_19 = arith.constant 1 : index
    %c0_20 = arith.constant 0 : index
    %32 = vector.load %arg4[%c1_19, %c0_20] : memref<7x32xf32, #tpu.memory_space<vmem>>, vector<1x32xf32>
    %33 = vector.broadcast %32 : vector<1x32xf32> to vector<2x32xf32>
    %34 = arith.addf %31, %33 : vector<2x32xf32>
    %cst_21 = arith.constant 0.000000e+00 : f32
    %35 = vector.broadcast %cst_21 : f32 to vector<2x32xf32>
    %36 = arith.maximumf %34, %35 : vector<2x32xf32>
    %37 = arith.truncf %36 : vector<2x32xf32> to vector<2x32xbf16>
    %c2 = arith.constant 2 : index
    %c0_22 = arith.constant 0 : index
    %c0_23 = arith.constant 0 : index
    %38 = vector.load %arg3[%c2, %c0_22, %c0_23] : memref<7x32x32xbf16, #tpu.memory_space<vmem>>, vector<1x32x32xbf16>
    %39 = vector.shape_cast %38 : vector<1x32x32xbf16> to vector<32x32xbf16>
    %cst_24 = arith.constant dense<0.000000e+00> : vector<2x32xf32>
    %40 = tpu.matmul %37, %39, %cst_24 {dimension_numbers = #tpu.dot_dimension_numbers<[1], [0], [0], [1], [0, 0, 1, 1], [], []>} : vector<2x32xbf16>, vector<32x32xbf16>, vector<2x32xf32> -> vector<2x32xf32>
    %c2_25 = arith.constant 2 : index
    %c0_26 = arith.constant 0 : index
    %41 = vector.load %arg4[%c2_25, %c0_26] : memref<7x32xf32, #tpu.memory_space<vmem>>, vector<1x32xf32>
    %42 = vector.broadcast %41 : vector<1x32xf32> to vector<2x32xf32>
    %43 = arith.addf %40, %42 : vector<2x32xf32>
    %cst_27 = arith.constant 0.000000e+00 : f32
    %44 = vector.broadcast %cst_27 : f32 to vector<2x32xf32>
    %45 = arith.maximumf %43, %44 : vector<2x32xf32>
    %46 = arith.truncf %45 : vector<2x32xf32> to vector<2x32xbf16>
    %c3 = arith.constant 3 : index
    %c0_28 = arith.constant 0 : index
    %c0_29 = arith.constant 0 : index
    %47 = vector.load %arg3[%c3, %c0_28, %c0_29] : memref<7x32x32xbf16, #tpu.memory_space<vmem>>, vector<1x32x32xbf16>
    %48 = vector.shape_cast %47 : vector<1x32x32xbf16> to vector<32x32xbf16>
    %cst_30 = arith.constant dense<0.000000e+00> : vector<2x32xf32>
    %49 = tpu.matmul %46, %48, %cst_30 {dimension_numbers = #tpu.dot_dimension_numbers<[1], [0], [0], [1], [0, 0, 1, 1], [], []>} : vector<2x32xbf16>, vector<32x32xbf16>, vector<2x32xf32> -> vector<2x32xf32>
    %c3_31 = arith.constant 3 : index
    %c0_32 = arith.constant 0 : index
    %50 = vector.load %arg4[%c3_31, %c0_32] : memref<7x32xf32, #tpu.memory_space<vmem>>, vector<1x32xf32>
    %51 = vector.broadcast %50 : vector<1x32xf32> to vector<2x32xf32>
    %52 = arith.addf %49, %51 : vector<2x32xf32>
    %cst_33 = arith.constant 0.000000e+00 : f32
    %53 = vector.broadcast %cst_33 : f32 to vector<2x32xf32>
    %54 = arith.maximumf %52, %53 : vector<2x32xf32>
    %55 = arith.truncf %54 : vector<2x32xf32> to vector<2x32xbf16>
    %c4 = arith.constant 4 : index
    %c0_34 = arith.constant 0 : index
    %c0_35 = arith.constant 0 : index
    %56 = vector.load %arg3[%c4, %c0_34, %c0_35] : memref<7x32x32xbf16, #tpu.memory_space<vmem>>, vector<1x32x32xbf16>
    %57 = vector.shape_cast %56 : vector<1x32x32xbf16> to vector<32x32xbf16>
    %cst_36 = arith.constant dense<0.000000e+00> : vector<2x32xf32>
    %58 = tpu.matmul %55, %57, %cst_36 {dimension_numbers = #tpu.dot_dimension_numbers<[1], [0], [0], [1], [0, 0, 1, 1], [], []>} : vector<2x32xbf16>, vector<32x32xbf16>, vector<2x32xf32> -> vector<2x32xf32>
    %c4_37 = arith.constant 4 : index
    %c0_38 = arith.constant 0 : index
    %59 = vector.load %arg4[%c4_37, %c0_38] : memref<7x32xf32, #tpu.memory_space<vmem>>, vector<1x32xf32>
    %60 = vector.broadcast %59 : vector<1x32xf32> to vector<2x32xf32>
    %61 = arith.addf %58, %60 : vector<2x32xf32>
    %cst_39 = arith.constant 0.000000e+00 : f32
    %62 = vector.broadcast %cst_39 : f32 to vector<2x32xf32>
    %63 = arith.maximumf %61, %62 : vector<2x32xf32>
    %64 = arith.truncf %63 : vector<2x32xf32> to vector<2x32xbf16>
    %c5 = arith.constant 5 : index
    %c0_40 = arith.constant 0 : index
    %c0_41 = arith.constant 0 : index
    %65 = vector.load %arg3[%c5, %c0_40, %c0_41] : memref<7x32x32xbf16, #tpu.memory_space<vmem>>, vector<1x32x32xbf16>
    %66 = vector.shape_cast %65 : vector<1x32x32xbf16> to vector<32x32xbf16>
    %cst_42 = arith.constant dense<0.000000e+00> : vector<2x32xf32>
    %67 = tpu.matmul %64, %66, %cst_42 {dimension_numbers = #tpu.dot_dimension_numbers<[1], [0], [0], [1], [0, 0, 1, 1], [], []>} : vector<2x32xbf16>, vector<32x32xbf16>, vector<2x32xf32> -> vector<2x32xf32>
    %c5_43 = arith.constant 5 : index
    %c0_44 = arith.constant 0 : index
    %68 = vector.load %arg4[%c5_43, %c0_44] : memref<7x32xf32, #tpu.memory_space<vmem>>, vector<1x32xf32>
    %69 = vector.broadcast %68 : vector<1x32xf32> to vector<2x32xf32>
    %70 = arith.addf %67, %69 : vector<2x32xf32>
    %cst_45 = arith.constant 0.000000e+00 : f32
    %71 = vector.broadcast %cst_45 : f32 to vector<2x32xf32>
    %72 = arith.maximumf %70, %71 : vector<2x32xf32>
    %73 = arith.truncf %72 : vector<2x32xf32> to vector<2x32xbf16>
    %c6 = arith.constant 6 : index
    %c0_46 = arith.constant 0 : index
    %c0_47 = arith.constant 0 : index
    %74 = vector.load %arg3[%c6, %c0_46, %c0_47] : memref<7x32x32xbf16, #tpu.memory_space<vmem>>, vector<1x32x32xbf16>
    %75 = vector.shape_cast %74 : vector<1x32x32xbf16> to vector<32x32xbf16>
    %cst_48 = arith.constant dense<0.000000e+00> : vector<2x32xf32>
    %76 = tpu.matmul %73, %75, %cst_48 {dimension_numbers = #tpu.dot_dimension_numbers<[1], [0], [0], [1], [0, 0, 1, 1], [], []>} : vector<2x32xbf16>, vector<32x32xbf16>, vector<2x32xf32> -> vector<2x32xf32>
    %c6_49 = arith.constant 6 : index
    %c0_50 = arith.constant 0 : index
    %77 = vector.load %arg4[%c6_49, %c0_50] : memref<7x32xf32, #tpu.memory_space<vmem>>, vector<1x32xf32>
    %78 = vector.broadcast %77 : vector<1x32xf32> to vector<2x32xf32>
    %79 = arith.addf %76, %78 : vector<2x32xf32>
    %80 = arith.truncf %79 : vector<2x32xf32> to vector<2x32xbf16>
    %c0_51 = arith.constant 0 : index
    %c0_52 = arith.constant 0 : index
    %81 = vector.load %arg5[%c0_51, %c0_52] : memref<2x32xbf16, #tpu.memory_space<vmem>>, vector<2x32xbf16>
    tpu.vector_store %arg5[%c0_51, %c0_52], %80 {strides = array<i32>} : memref<2x32xbf16, #tpu.memory_space<vmem>>, vector<2x32xbf16>,
    return
  }
}

</mosaic_0001>

<llo_original>
// kernel: tpu_custom_call.1
$region0: #{tpu_custom_call.1}
  #allocation0 [shape = 'u32[]', space=smem, size = 0x4, offset = 0x4, fixed_abs, tag = 'smem constant byte address 0x4 - core index']
  #allocation1 [shape = 'u32[144,128]{1,0:T(1,128)}', space=vmem, size = 0x12000, scoped, tag = 'internal scratch']
  %s0 = inlined_call_operand.hbm [shape: f32[2,32], index: 0, kind: input, shape index: {}]
  %s1 = inlined_call_operand.hbm [shape: bf16[32,32], index: 1, kind: input, shape index: {}]
  %s2 = inlined_call_operand.vmem [shape: f32[1,32], index: 2, kind: input, shape index: {}]
  %s3 = inlined_call_operand.hbm [shape: bf16[7,32,32], index: 3, kind: input, shape index: {}]
  %s4 = inlined_call_operand.vmem [shape: f32[7,32], index: 4, kind: input, shape index: {}]
  %s5 = inlined_call_operand.hbm [shape: bf16[2,32], index: 5, kind: output, shape index: {}]
  %s6 = sld [smem:[#allocation0]]
  $region42: #{tpu_custom_call.1} parent=0
    _
  %s8 = ssub.s32 1, %s6
  %s9 = scalar_select 0, %s8, %s6
  $region1: #{tpu_custom_call.1} parent=0
    #allocation2 [shape = 'u8[1024]{0}', space=vmem, size = 0x400, scoped, tag = 'input window, operand 0, single buffered']
    #allocation3 [shape = 's32[1]{0}', space=sflag, size = 0x4, scoped, tag = 'scoped memory for tpu_custom_call.1']
    #allocation4 [shape = 's32[1]{0}', space=sflag, size = 0x4, scoped, tag = 'scoped memory for tpu_custom_call.1']
    #allocation5 [shape = 'u8[8192]{0}', space=vmem, size = 0x2000, scoped, tag = 'input window, operand 1, single buffered']
    #allocation6 [shape = 's32[1]{0}', space=sflag, size = 0x4, scoped, tag = 'scoped memory for tpu_custom_call.1']
    #allocation7 [shape = 'u8[57344]{0}', space=vmem, size = 0xe000, scoped, tag = 'input window, operand 3, single buffered']
    #allocation8 [shape = 'u8[512]{0}', space=vmem, size = 0x400, scoped, tag = 'output window, operand 0, single buffered']
    %10 = vsyncpa [#allocation3], 0
    %11 = vsyncpa [#allocation6], 0
    %12 = vsyncpa [#allocation4], 0
    // Predicated region
    $region2: #{tpu_custom_call.1} parent=1 // pred_check
      _
    $region3: #{tpu_custom_call.1} parent=1 // pred_check_branch
      %14 = sbr.rel (0) target = $region5
    $region4: #{tpu_custom_call.1} parent=1 // pred_region
      %s16 = ssub.s32 32, 32
      %17 = vsyncadd [#allocation3], %s16
      %s19 = sshll.u32 [#allocation2], 4
      %s20 = int_to_ptr.vmem [resolvable:$true] %s19
      %22 = dma.hbm_to_vmem [thread:$0]  %s0, 32, %s20, [#allocation3]
    $region5: #{tpu_custom_call.1} parent=1 // pred_fallthru
      _
    // Predicated region
    $region6: #{tpu_custom_call.1} parent=1 // pred_check
      _
    $region7: #{tpu_custom_call.1} parent=1 // pred_check_branch
      %24 = sbr.rel (0) target = $region9
    $region8: #{tpu_custom_call.1} parent=1 // pred_region
      %s26 = ssub.s32 256, 256
      %27 = vsyncadd [#allocation6], %s26
      %s28 = sshll.u32 [#allocation5], 4
      %s29 = int_to_ptr.vmem [resolvable:$true] %s28
      %34 = dma.hbm_to_vmem [thread:$0]  %s1, 256, %s29, [#allocation6], 64, 64, 4
    $region9: #{tpu_custom_call.1} parent=1 // pred_fallthru
      _
    // Predicated region
    $region10: #{tpu_custom_call.1} parent=1 // pred_check
      _
    $region11: #{tpu_custom_call.1} parent=1 // pred_check_branch
      %36 = sbr.rel (0) target = $region13
    $region12: #{tpu_custom_call.1} parent=1 // pred_region
      _
    $region13: #{tpu_custom_call.1} parent=1 // pred_fallthru
      _
    // Predicated region
    $region14: #{tpu_custom_call.1} parent=1 // pred_check
      _
    $region15: #{tpu_custom_call.1} parent=1 // pred_check_branch
      %38 = sbr.rel (0) target = $region17
    $region16: #{tpu_custom_call.1} parent=1 // pred_region
      %s40 = ssub.s32 1792, 1792
      %41 = vsyncadd [#allocation6], %s40
      %s42 = sshll.u32 [#allocation7], 4
      %s43 = int_to_ptr.vmem [resolvable:$true] %s42
      %48 = dma.hbm_to_vmem [thread:$0]  %s3, 1792, %s43, [#allocation6], 64, 64, 4
    $region17: #{tpu_custom_call.1} parent=1 // pred_fallthru
      _
    // Predicated region
    $region18: #{tpu_custom_call.1} parent=1 // pred_check
      _
    $region19: #{tpu_custom_call.1} parent=1 // pred_check_branch
      %50 = sbr.rel (0) target = $region21
    $region20: #{tpu_custom_call.1} parent=1 // pred_region
      _
    $region21: #{tpu_custom_call.1} parent=1 // pred_fallthru
      _
    // Predicated region
    $region22: #{tpu_custom_call.1} parent=1 // pred_check
      _
    $region23: #{tpu_custom_call.1} parent=1 // pred_check_branch
      %52 = sbr.rel (0) target = $region25
    $region24: #{tpu_custom_call.1} parent=1 // pred_region
      %53 = dma.done [#allocation3], 32
    $region25: #{tpu_custom_call.1} parent=1 // pred_fallthru
      _
    // Predicated region
    $region26: #{tpu_custom_call.1} parent=1 // pred_check
      _
    $region27: #{tpu_custom_call.1} parent=1 // pred_check_branch
      %55 = sbr.rel (0) target = $region29
    $region28: #{tpu_custom_call.1} parent=1 // pred_region
      %56 = dma.done [#allocation6], 256
    $region29: #{tpu_custom_call.1} parent=1 // pred_fallthru
      _
    // Predicated region
    $region30: #{tpu_custom_call.1} parent=1 // pred_check
      _
    $region31: #{tpu_custom_call.1} parent=1 // pred_check_branch
      %58 = sbr.rel (0) target = $region33
    $region32: #{tpu_custom_call.1} parent=1 // pred_region
      %59 = dma.done [#allocation6], 1792
    $region33: #{tpu_custom_call.1} parent=1 // pred_fallthru
      _
    %v61 = vld [vmem:[#allocation2] sm:$0x3]
    %v62 = vmul.f32 %v61, %v61
    %vm63 = vcmask 254976
    %v64 = vsel %vm63, %v62, 0.0
    %65 = vadd.xlane.f32.xlu0 %v64
    %v66 = vpop.xlane.xlu0 %65
    %v67 = vrcp.pop 32.0
    %v68 = vmul.f32 %v66, %v67
    %v69 = vadd.f32 %v68, 1e-08
    %v70 = vrsqrt.pop %v69
    %v71 = vmul.f32 %v61, %v70
    %v72 = vpack.c.bf16 %v71, %v71
    %v73 = vld [vmem:[#allocation5] sm:$0xf]
    %v74 = vld [vmem:[#allocation5 + $0x4] sm:$0xf]
    %v75 = vld [vmem:[#allocation5 + $0x8] sm:$0xf]
    %v76 = vld [vmem:[#allocation5 + $0xc] sm:$0xf]
    %v77 = vld [vmem:[%s2] sm:$0x1]
    %v79 = vlaneseq
    %v80 = vshrl.u32 %v79, 7
    %v81 = vsub.s32 0, %v80
    %v82 = vrot.slane %v77, %v81
    %v88 = vunpack.c.l.b16 %v73
    %v89 = vunpack.c.l.b16 %v74
    %v90 = vunpack.c.l.b16 %v75
    %v91 = vunpack.c.l.b16 %v76
    %v92 = vpack.c.b16 %v89, %v88
    %v93 = vpack.c.b16 %v91, %v90
    %vm96 = vcmask 261120
    %v98 = vsel %vm96, %v72, 0
    %100 = vmatprep.subr.bf16.mxu0 0
    %101 = vmatpush1.bf16.msra.mxu0 %v92
    %102 = vmatprep.subr.bf16.mxu0 0
    %103 = vmatpush1.bf16.msra.mxu0 %v93
    %104 = vmatprep.subr.bf16.mxu0 0
    %105 = vmatpush1.bf16.msra.mxu0 0
    %106 = vmatprep.subr.bf16.mxu0 0
    %107 = vmatpush1.bf16.msra.mxu0 0
    %108 = vmatprep.subr.bf16.mxu0 0
    %109 = vmatpush1.bf16.msra.mxu0 0
    %110 = vmatprep.subr.bf16.mxu0 0
    %111 = vmatpush1.bf16.msra.mxu0 0
    %112 = vmatprep.subr.bf16.mxu0 0
    %113 = vmatpush1.bf16.msra.mxu0 0
    %114 = vmatprep.subr.bf16.mxu0 0
    %115 = vmatpush1.bf16.msra.mxu0 0
    %116 = vmatprep.subr.bf16.mxu0 0
    %117 = vmatpush1.bf16.msra.mxu0 0
    %118 = vmatprep.subr.bf16.mxu0 0
    %119 = vmatpush1.bf16.msra.mxu0 0
    %120 = vmatprep.subr.bf16.mxu0 0
    %121 = vmatpush1.bf16.msra.mxu0 0
    %122 = vmatprep.subr.bf16.mxu0 0
    %123 = vmatpush1.bf16.msra.mxu0 0
    %124 = vmatprep.subr.bf16.mxu0 0
    %125 = vmatpush1.bf16.msra.mxu0 0
    %126 = vmatprep.subr.bf16.mxu0 0
    %127 = vmatpush1.bf16.msra.mxu0 0
    %128 = vmatprep.subr.bf16.mxu0 0
    %129 = vmatpush1.bf16.msra.mxu0 0
    %130 = vmatprep.subr.bf16.mxu0 0
    %131 = vmatpush1.bf16.msra.mxu0 0
    %132 = vmatprep.mubr.bf16.mxu0 0
    %133 = vmatmul.mubr.bf16.gmra.mrb[0].mxu0 %v98
    %v134 = vpop.f32.mrb[0].mxu0
    %v135 = vadd.f32 %v82, %v134
    %v136 = vpop.f32.mrb[0].mxu0
    %v137 = vpop.f32.mrb[0].mxu0
    %v138 = vpop.f32.mrb[0].mxu0
    %139 = vdwg.mxu0
    %v140 = vmax.f32 %v135, 0.0
    %v141 = vpack.c.bf16 %v140, %v140
    %v142 = vld [vmem:[#allocation7] sm:$0xf]
    %v143 = vld [vmem:[#allocation7 + $0x4] sm:$0xf]
    %v144 = vld [vmem:[#allocation7 + $0x8] sm:$0xf]
    %v145 = vld [vmem:[#allocation7 + $0xc] sm:$0xf]
    %v146 = vld [vmem:[%s4] sm:$0x1]
    %v147 = vlaneseq
    %v148 = vshrl.u32 %v147, 7
    %v149 = vsub.s32 0, %v148
    %v150 = vrot.slane %v146, %v149
    %v155 = vunpack.c.l.b16 %v142
    %v156 = vunpack.c.l.b16 %v143
    %v157 = vunpack.c.l.b16 %v144
    %v158 = vunpack.c.l.b16 %v145
    %v159 = vpack.c.b16 %v156, %v155
    %v160 = vpack.c.b16 %v158, %v157
    %v164 = vsel %vm96, %v141, 0
    %166 = vmatprep.subr.bf16.mxu0 0
    %167 = vmatpush1.bf16.msra.mxu0 %v159
    %168 = vmatprep.subr.bf16.mxu0 0
    %169 = vmatpush1.bf16.msra.mxu0 %v160
    %170 = vmatprep.subr.bf16.mxu0 0
    %171 = vmatpush1.bf16.msra.mxu0 0
    %172 = vmatprep.subr.bf16.mxu0 0
    %173 = vmatpush1.bf16.msra.mxu0 0
    %174 = vmatprep.subr.bf16.mxu0 0
    %175 = vmatpush1.bf16.msra.mxu0 0
    %176 = vmatprep.subr.bf16.mxu0 0
    %177 = vmatpush1.bf16.msra.mxu0 0
    %178 = vmatprep.subr.bf16.mxu0 0
    %179 = vmatpush1.bf16.msra.mxu0 0
    %180 = vmatprep.subr.bf16.mxu0 0
    %181 = vmatpush1.bf16.msra.mxu0 0
    %182 = vmatprep.subr.bf16.mxu0 0
    %183 = vmatpush1.bf16.msra.mxu0 0
    %184 = vmatprep.subr.bf16.mxu0 0
    %185 = vmatpush1.bf16.msra.mxu0 0
    %186 = vmatprep.subr.bf16.mxu0 0
    %187 = vmatpush1.bf16.msra.mxu0 0
    %188 = vmatprep.subr.bf16.mxu0 0
    %189 = vmatpush1.bf16.msra.mxu0 0
    %190 = vmatprep.subr.bf16.mxu0 0
    %191 = vmatpush1.bf16.msra.mxu0 0
    %192 = vmatprep.subr.bf16.mxu0 0
    %193 = vmatpush1.bf16.msra.mxu0 0
    %194 = vmatprep.subr.bf16.mxu0 0
    %195 = vmatpush1.bf16.msra.mxu0 0
    %196 = vmatprep.subr.bf16.mxu0 0
    %197 = vmatpush1.bf16.msra.mxu0 0
    %198 = vmatprep.mubr.bf16.mxu0 0
    %199 = vmatmul.mubr.bf16.gmra.mrb[0].mxu0 %v164
    %v200 = vpop.f32.mrb[0].mxu0
    %v201 = vadd.f32 %v150, %v200
    %v202 = vpop.f32.mrb[0].mxu0
    %v203 = vpop.f32.mrb[0].mxu0
    %v204 = vpop.f32.mrb[0].mxu0
    %205 = vdwg.mxu0
    %v206 = vmax.f32 %v201, 0.0
    %v207 = vpack.c.bf16 %v206, %v206
    %s208 = scalar_lea.vmem [#allocation7], 16
    %v209 = vld [vmem:[%s208] sm:$0xf]
    %v210 = vld [vmem:[%s208 + $0x4] sm:$0xf]
    %v211 = vld [vmem:[%s208 + $0x8] sm:$0xf]
    %v212 = vld [vmem:[%s208 + $0xc] sm:$0xf]
    %v213 = vld [vmem:[%s4 + $0x1] sm:$0x1]
    %v214 = vlaneseq
    %v215 = vshrl.u32 %v214, 7
    %v216 = vsub.s32 0, %v215
    %v217 = vrot.slane %v213, %v216
    %v222 = vunpack.c.l.b16 %v209
    %v223 = vunpack.c.l.b16 %v210
    %v224 = vunpack.c.l.b16 %v211
    %v225 = vunpack.c.l.b16 %v212
    %v226 = vpack.c.b16 %v223, %v222
    %v227 = vpack.c.b16 %v225, %v224
    %v231 = vsel %vm96, %v207, 0
    %233 = vmatprep.subr.bf16.mxu0 0
    %234 = vmatpush1.bf16.msra.mxu0 %v226
    %235 = vmatprep.subr.bf16.mxu0 0
    %236 = vmatpush1.bf16.msra.mxu0 %v227
    %237 = vmatprep.subr.bf16.mxu0 0
    %238 = vmatpush1.bf16.msra.mxu0 0
    %239 = vmatprep.subr.bf16.mxu0 0
    %240 = vmatpush1.bf16.msra.mxu0 0
    %241 = vmatprep.subr.bf16.mxu0 0
    %242 = vmatpush1.bf16.msra.mxu0 0
    %243 = vmatprep.subr.bf16.mxu0 0
    %244 = vmatpush1.bf16.msra.mxu0 0
    %245 = vmatprep.subr.bf16.mxu0 0
    %246 = vmatpush1.bf16.msra.mxu0 0
    %247 = vmatprep.subr.bf16.mxu0 0
    %248 = vmatpush1.bf16.msra.mxu0 0
    %249 = vmatprep.subr.bf16.mxu0 0
    %250 = vmatpush1.bf16.msra.mxu0 0
    %251 = vmatprep.subr.bf16.mxu0 0
    %252 = vmatpush1.bf16.msra.mxu0 0
    %253 = vmatprep.subr.bf16.mxu0 0
    %254 = vmatpush1.bf16.msra.mxu0 0
    %255 = vmatprep.subr.bf16.mxu0 0
    %256 = vmatpush1.bf16.msra.mxu0 0
    %257 = vmatprep.subr.bf16.mxu0 0
    %258 = vmatpush1.bf16.msra.mxu0 0
    %259 = vmatprep.subr.bf16.mxu0 0
    %260 = vmatpush1.bf16.msra.mxu0 0
    %261 = vmatprep.subr.bf16.mxu0 0
    %262 = vmatpush1.bf16.msra.mxu0 0
    %263 = vmatprep.subr.bf16.mxu0 0
    %264 = vmatpush1.bf16.msra.mxu0 0
    %265 = vmatprep.mubr.bf16.mxu0 0
    %266 = vmatmul.mubr.bf16.gmra.mrb[0].mxu0 %v231
    %v267 = vpop.f32.mrb[0].mxu0
    %v268 = vadd.f32 %v217, %v267
    %v269 = vpop.f32.mrb[0].mxu0
    %v270 = vpop.f32.mrb[0].mxu0
    %v271 = vpop.f32.mrb[0].mxu0
    %272 = vdwg.mxu0
    %v273 = vmax.f32 %v268, 0.0
    %v274 = vpack.c.bf16 %v273, %v273
    %s275 = scalar_lea.vmem [#allocation7], 32
    %v276 = vld [vmem:[%s275] sm:$0xf]
    %v277 = vld [vmem:[%s275 + $0x4] sm:$0xf]
    %v278 = vld [vmem:[%s275 + $0x8] sm:$0xf]
    %v279 = vld [vmem:[%s275 + $0xc] sm:$0xf]
    %v280 = vld [vmem:[%s4 + $0x2] sm:$0x1]
    %v281 = vlaneseq
    %v282 = vshrl.u32 %v281, 7
    %v283 = vsub.s32 0, %v282
    %v284 = vrot.slane %v280, %v283
    %v289 = vunpack.c.l.b16 %v276
    %v290 = vunpack.c.l.b16 %v277
    %v291 = vunpack.c.l.b16 %v278
    %v292 = vunpack.c.l.b16 %v279
    %v293 = vpack.c.b16 %v290, %v289
    %v294 = vpack.c.b16 %v292, %v291
    %v298 = vsel %vm96, %v274, 0
    %300 = vmatprep.subr.bf16.mxu0 0
    %301 = vmatpush1.bf16.msra.mxu0 %v293
    %302 = vmatprep.subr.bf16.mxu0 0
    %303 = vmatpush1.bf16.msra.mxu0 %v294
    %304 = vmatprep.subr.bf16.mxu0 0
    %305 = vmatpush1.bf16.msra.mxu0 0
    %306 = vmatprep.subr.bf16.mxu0 0
    %307 = vmatpush1.bf16.msra.mxu0 0
    %308 = vmatprep.subr.bf16.mxu0 0
    %309 = vmatpush1.bf16.msra.mxu0 0
    %310 = vmatprep.subr.bf16.mxu0 0
    %311 = vmatpush1.bf16.msra.mxu0 0
    %312 = vmatprep.subr.bf16.mxu0 0
    %313 = vmatpush1.bf16.msra.mxu0 0
    %314 = vmatprep.subr.bf16.mxu0 0
    %315 = vmatpush1.bf16.msra.mxu0 0
    %316 = vmatprep.subr.bf16.mxu0 0
    %317 = vmatpush1.bf16.msra.mxu0 0
    %318 = vmatprep.subr.bf16.mxu0 0
    %319 = vmatpush1.bf16.msra.mxu0 0
    %320 = vmatprep.subr.bf16.mxu0 0
    %321 = vmatpush1.bf16.msra.mxu0 0
    %322 = vmatprep.subr.bf16.mxu0 0
    %323 = vmatpush1.bf16.msra.mxu0 0
    %324 = vmatprep.subr.bf16.mxu0 0
    %325 = vmatpush1.bf16.msra.mxu0 0
    %326 = vmatprep.subr.bf16.mxu0 0
    %327 = vmatpush1.bf16.msra.mxu0 0
    %328 = vmatprep.subr.bf16.mxu0 0
    %329 = vmatpush1.bf16.msra.mxu0 0
    %330 = vmatprep.subr.bf16.mxu0 0
    %331 = vmatpush1.bf16.msra.mxu0 0
    %332 = vmatprep.mubr.bf16.mxu0 0
    %333 = vmatmul.mubr.bf16.gmra.mrb[0].mxu0 %v298
    %v334 = vpop.f32.mrb[0].mxu0
    %v335 = vadd.f32 %v284, %v334
    %v336 = vpop.f32.mrb[0].mxu0
    %v337 = vpop.f32.mrb[0].mxu0
    %v338 = vpop.f32.mrb[0].mxu0
    %339 = vdwg.mxu0
    %v340 = vmax.f32 %v335, 0.0
    %v341 = vpack.c.bf16 %v340, %v340
    %s342 = scalar_lea.vmem [#allocation7], 48
    %v343 = vld [vmem:[%s342] sm:$0xf]
    %v344 = vld [vmem:[%s342 + $0x4] sm:$0xf]
    %v345 = vld [vmem:[%s342 + $0x8] sm:$0xf]
    %v346 = vld [vmem:[%s342 + $0xc] sm:$0xf]
    %v347 = vld [vmem:[%s4 + $0x3] sm:$0x1]
    %v348 = vlaneseq
    %v349 = vshrl.u32 %v348, 7
    %v350 = vsub.s32 0, %v349
    %v351 = vrot.slane %v347, %v350
    %v356 = vunpack.c.l.b16 %v343
    %v357 = vunpack.c.l.b16 %v344
    %v358 = vunpack.c.l.b16 %v345
    %v359 = vunpack.c.l.b16 %v346
    %v360 = vpack.c.b16 %v357, %v356
    %v361 = vpack.c.b16 %v359, %v358
    %v365 = vsel %vm96, %v341, 0
    %367 = vmatprep.subr.bf16.mxu0 0
    %368 = vmatpush1.bf16.msra.mxu0 %v360
    %369 = vmatprep.subr.bf16.mxu0 0
    %370 = vmatpush1.bf16.msra.mxu0 %v361
    %371 = vmatprep.subr.bf16.mxu0 0
    %372 = vmatpush1.bf16.msra.mxu0 0
    %373 = vmatprep.subr.bf16.mxu0 0
    %374 = vmatpush1.bf16.msra.mxu0 0
    %375 = vmatprep.subr.bf16.mxu0 0
    %376 = vmatpush1.bf16.msra.mxu0 0
    %377 = vmatprep.subr.bf16.mxu0 0
    %378 = vmatpush1.bf16.msra.mxu0 0
    %379 = vmatprep.subr.bf16.mxu0 0
    %380 = vmatpush1.bf16.msra.mxu0 0
    %381 = vmatprep.subr.bf16.mxu0 0
    %382 = vmatpush1.bf16.msra.mxu0 0
    %383 = vmatprep.subr.bf16.mxu0 0
    %384 = vmatpush1.bf16.msra.mxu0 0
    %385 = vmatprep.subr.bf16.mxu0 0
    %386 = vmatpush1.bf16.msra.mxu0 0
    %387 = vmatprep.subr.bf16.mxu0 0
    %388 = vmatpush1.bf16.msra.mxu0 0
    %389 = vmatprep.subr.bf16.mxu0 0
    %390 = vmatpush1.bf16.msra.mxu0 0
    %391 = vmatprep.subr.bf16.mxu0 0
    %392 = vmatpush1.bf16.msra.mxu0 0
    %393 = vmatprep.subr.bf16.mxu0 0
    %394 = vmatpush1.bf16.msra.mxu0 0
    %395 = vmatprep.subr.bf16.mxu0 0
    %396 = vmatpush1.bf16.msra.mxu0 0
    %397 = vmatprep.subr.bf16.mxu0 0
    %398 = vmatpush1.bf16.msra.mxu0 0
    %399 = vmatprep.mubr.bf16.mxu0 0
    %400 = vmatmul.mubr.bf16.gmra.mrb[0].mxu0 %v365
    %v401 = vpop.f32.mrb[0].mxu0
    %v402 = vadd.f32 %v351, %v401
    %v403 = vpop.f32.mrb[0].mxu0
    %v404 = vpop.f32.mrb[0].mxu0
    %v405 = vpop.f32.mrb[0].mxu0
    %406 = vdwg.mxu0
    %v407 = vmax.f32 %v402, 0.0
    %v408 = vpack.c.bf16 %v407, %v407
    %s409 = scalar_lea.vmem [#allocation7], 64
    %v410 = vld [vmem:[%s409] sm:$0xf]
    %v411 = vld [vmem:[%s409 + $0x4] sm:$0xf]
    %v412 = vld [vmem:[%s409 + $0x8] sm:$0xf]
    %v413 = vld [vmem:[%s409 + $0xc] sm:$0xf]
    %v414 = vld [vmem:[%s4 + $0x4] sm:$0x1]
    %v415 = vlaneseq
    %v416 = vshrl.u32 %v415, 7
    %v417 = vsub.s32 0, %v416
    %v418 = vrot.slane %v414, %v417
    %v423 = vunpack.c.l.b16 %v410
    %v424 = vunpack.c.l.b16 %v411
    %v425 = vunpack.c.l.b16 %v412
    %v426 = vunpack.c.l.b16 %v413
    %v427 = vpack.c.b16 %v424, %v423
    %v428 = vpack.c.b16 %v426, %v425
    %v432 = vsel %vm96, %v408, 0
    %434 = vmatprep.subr.bf16.mxu0 0
    %435 = vmatpush1.bf16.msra.mxu0 %v427
    %436 = vmatprep.subr.bf16.mxu0 0
    %437 = vmatpush1.bf16.msra.mxu0 %v428
    %438 = vmatprep.subr.bf16.mxu0 0
    %439 = vmatpush1.bf16.msra.mxu0 0
    %440 = vmatprep.subr.bf16.mxu0 0
    %441 = vmatpush1.bf16.msra.mxu0 0
    %442 = vmatprep.subr.bf16.mxu0 0
    %443 = vmatpush1.bf16.msra.mxu0 0
    %444 = vmatprep.subr.bf16.mxu0 0
    %445 = vmatpush1.bf16.msra.mxu0 0
    %446 = vmatprep.subr.bf16.mxu0 0
    %447 = vmatpush1.bf16.msra.mxu0 0
    %448 = vmatprep.subr.bf16.mxu0 0
    %449 = vmatpush1.bf16.msra.mxu0 0
    %450 = vmatprep.subr.bf16.mxu0 0
    %451 = vmatpush1.bf16.msra.mxu0 0
    %452 = vmatprep.subr.bf16.mxu0 0
    %453 = vmatpush1.bf16.msra.mxu0 0
    %454 = vmatprep.subr.bf16.mxu0 0
    %455 = vmatpush1.bf16.msra.mxu0 0
    %456 = vmatprep.subr.bf16.mxu0 0
    %457 = vmatpush1.bf16.msra.mxu0 0
    %458 = vmatprep.subr.bf16.mxu0 0
    %459 = vmatpush1.bf16.msra.mxu0 0
    %460 = vmatprep.subr.bf16.mxu0 0
    %461 = vmatpush1.bf16.msra.mxu0 0
    %462 = vmatprep.subr.bf16.mxu0 0
    %463 = vmatpush1.bf16.msra.mxu0 0
    %464 = vmatprep.subr.bf16.mxu0 0
    %465 = vmatpush1.bf16.msra.mxu0 0
    %466 = vmatprep.mubr.bf16.mxu0 0
    %467 = vmatmul.mubr.bf16.gmra.mrb[0].mxu0 %v432
    %v468 = vpop.f32.mrb[0].mxu0
    %v469 = vadd.f32 %v418, %v468
    %v470 = vpop.f32.mrb[0].mxu0
    %v471 = vpop.f32.mrb[0].mxu0
    %v472 = vpop.f32.mrb[0].mxu0
    %473 = vdwg.mxu0
    %v474 = vmax.f32 %v469, 0.0
    %v475 = vpack.c.bf16 %v474, %v474
    %s476 = scalar_lea.vmem [#allocation7], 80
    %v477 = vld [vmem:[%s476] sm:$0xf]
    %v478 = vld [vmem:[%s476 + $0x4] sm:$0xf]
    %v479 = vld [vmem:[%s476 + $0x8] sm:$0xf]
    %v480 = vld [vmem:[%s476 + $0xc] sm:$0xf]
    %v481 = vld [vmem:[%s4 + $0x5] sm:$0x1]
    %v482 = vlaneseq
    %v483 = vshrl.u32 %v482, 7
    %v484 = vsub.s32 0, %v483
    %v485 = vrot.slane %v481, %v484
    %v490 = vunpack.c.l.b16 %v477
    %v491 = vunpack.c.l.b16 %v478
    %v492 = vunpack.c.l.b16 %v479
    %v493 = vunpack.c.l.b16 %v480
    %v494 = vpack.c.b16 %v491, %v490
    %v495 = vpack.c.b16 %v493, %v492
    %v499 = vsel %vm96, %v475, 0
    %501 = vmatprep.subr.bf16.mxu0 0
    %502 = vmatpush1.bf16.msra.mxu0 %v494
    %503 = vmatprep.subr.bf16.mxu0 0
    %504 = vmatpush1.bf16.msra.mxu0 %v495
    %505 = vmatprep.subr.bf16.mxu0 0
    %506 = vmatpush1.bf16.msra.mxu0 0
    %507 = vmatprep.subr.bf16.mxu0 0
    %508 = vmatpush1.bf16.msra.mxu0 0
    %509 = vmatprep.subr.bf16.mxu0 0
    %510 = vmatpush1.bf16.msra.mxu0 0
    %511 = vmatprep.subr.bf16.mxu0 0
    %512 = vmatpush1.bf16.msra.mxu0 0
    %513 = vmatprep.subr.bf16.mxu0 0
    %514 = vmatpush1.bf16.msra.mxu0 0
    %515 = vmatprep.subr.bf16.mxu0 0
    %516 = vmatpush1.bf16.msra.mxu0 0
    %517 = vmatprep.subr.bf16.mxu0 0
    %518 = vmatpush1.bf16.msra.mxu0 0
    %519 = vmatprep.subr.bf16.mxu0 0
    %520 = vmatpush1.bf16.msra.mxu0 0
    %521 = vmatprep.subr.bf16.mxu0 0
    %522 = vmatpush1.bf16.msra.mxu0 0
    %523 = vmatprep.subr.bf16.mxu0 0
    %524 = vmatpush1.bf16.msra.mxu0 0
    %525 = vmatprep.subr.bf16.mxu0 0
    %526 = vmatpush1.bf16.msra.mxu0 0
    %527 = vmatprep.subr.bf16.mxu0 0
    %528 = vmatpush1.bf16.msra.mxu0 0
    %529 = vmatprep.subr.bf16.mxu0 0
    %530 = vmatpush1.bf16.msra.mxu0 0
    %531 = vmatprep.subr.bf16.mxu0 0
    %532 = vmatpush1.bf16.msra.mxu0 0
    %533 = vmatprep.mubr.bf16.mxu0 0
    %534 = vmatmul.mubr.bf16.gmra.mrb[0].mxu0 %v499
    %v535 = vpop.f32.mrb[0].mxu0
    %v536 = vadd.f32 %v485, %v535
    %v537 = vpop.f32.mrb[0].mxu0
    %v538 = vpop.f32.mrb[0].mxu0
    %v539 = vpop.f32.mrb[0].mxu0
    %540 = vdwg.mxu0
    %v541 = vmax.f32 %v536, 0.0
    %v542 = vpack.c.bf16 %v541, %v541
    %s543 = scalar_lea.vmem [#allocation7], 96
    %v544 = vld [vmem:[%s543] sm:$0xf]
    %v545 = vld [vmem:[%s543 + $0x4] sm:$0xf]
    %v546 = vld [vmem:[%s543 + $0x8] sm:$0xf]
    %v547 = vld [vmem:[%s543 + $0xc] sm:$0xf]
    %v548 = vld [vmem:[%s4 + $0x6] sm:$0x1]
    %v549 = vlaneseq
    %v550 = vshrl.u32 %v549, 7
    %v551 = vsub.s32 0, %v550
    %v552 = vrot.slane %v548, %v551
    %v557 = vunpack.c.l.b16 %v544
    %v558 = vunpack.c.l.b16 %v545
    %v559 = vunpack.c.l.b16 %v546
    %v560 = vunpack.c.l.b16 %v547
    %v561 = vpack.c.b16 %v558, %v557
    %v562 = vpack.c.b16 %v560, %v559
    %v566 = vsel %vm96, %v542, 0
    %568 = vmatprep.subr.bf16.mxu0 0
    %569 = vmatpush1.bf16.msra.mxu0 %v561
    %570 = vmatprep.subr.bf16.mxu0 0
    %571 = vmatpush1.bf16.msra.mxu0 %v562
    %572 = vmatprep.subr.bf16.mxu0 0
    %573 = vmatpush1.bf16.msra.mxu0 0
    %574 = vmatprep.subr.bf16.mxu0 0
    %575 = vmatpush1.bf16.msra.mxu0 0
    %576 = vmatprep.subr.bf16.mxu0 0
    %577 = vmatpush1.bf16.msra.mxu0 0
    %578 = vmatprep.subr.bf16.mxu0 0
    %579 = vmatpush1.bf16.msra.mxu0 0
    %580 = vmatprep.subr.bf16.mxu0 0
    %581 = vmatpush1.bf16.msra.mxu0 0
    %582 = vmatprep.subr.bf16.mxu0 0
    %583 = vmatpush1.bf16.msra.mxu0 0
    %584 = vmatprep.subr.bf16.mxu0 0
    %585 = vmatpush1.bf16.msra.mxu0 0
    %586 = vmatprep.subr.bf16.mxu0 0
    %587 = vmatpush1.bf16.msra.mxu0 0
    %588 = vmatprep.subr.bf16.mxu0 0
    %589 = vmatpush1.bf16.msra.mxu0 0
    %590 = vmatprep.subr.bf16.mxu0 0
    %591 = vmatpush1.bf16.msra.mxu0 0
    %592 = vmatprep.subr.bf16.mxu0 0
    %593 = vmatpush1.bf16.msra.mxu0 0
    %594 = vmatprep.subr.bf16.mxu0 0
    %595 = vmatpush1.bf16.msra.mxu0 0
    %596 = vmatprep.subr.bf16.mxu0 0
    %597 = vmatpush1.bf16.msra.mxu0 0
    %598 = vmatprep.subr.bf16.mxu0 0
    %599 = vmatpush1.bf16.msra.mxu0 0
    %600 = vmatprep.mubr.bf16.mxu0 0
    %601 = vmatmul.mubr.bf16.gmra.mrb[0].mxu0 %v566
    %v602 = vpop.f32.mrb[0].mxu0
    %v603 = vadd.f32 %v552, %v602
    %v604 = vpop.f32.mrb[0].mxu0
    %v605 = vpop.f32.mrb[0].mxu0
    %v606 = vpop.f32.mrb[0].mxu0
    %607 = vdwg.mxu0
    %v608 = vpack.c.bf16 %v603, %v603
    %vm609 = vcmask 253952
    %610 = vst.msk [vmem:[#allocation8] sm:$0x1] %vm609, %v608
    // Predicated region
    $region34: #{tpu_custom_call.1} parent=1 // pred_check
      _
    $region35: #{tpu_custom_call.1} parent=1 // pred_check_branch
      %612 = sbr.rel (0) target = $region37
    $region36: #{tpu_custom_call.1} parent=1 // pred_region
      %s614 = ssub.s32 16, 16
      %615 = vsyncadd [#allocation4], %s614
      %s617 = sshll.u32 [#allocation8], 4
      %s618 = int_to_ptr.vmem [resolvable:$true] %s617
      %620 = dma.vmem_to_hbm [thread:$0]  %s618, 16, %s5, [#allocation4]
    $region37: #{tpu_custom_call.1} parent=1 // pred_fallthru
      _
    // Predicated region
    $region38: #{tpu_custom_call.1} parent=1 // pred_check
      _
    $region39: #{tpu_custom_call.1} parent=1 // pred_check_branch
      %622 = sbr.rel (0) target = $region41
    $region40: #{tpu_custom_call.1} parent=1 // pred_region
      %623 = dma.done [#allocation4], 16
    $region41: #{tpu_custom_call.1} parent=1 // pred_fallthru
      _
    %624 = vsyncpa [#allocation3], 1
    %625 = vsyncpa [#allocation6], 1
    %626 = vsyncpa [#allocation4], 1

</llo_original>
